<compile_context>
chip_gen: v5e
topology: v5e:2x2
jax: 0.10.0
libtpu: 0.0.40
codegen_flags: <defaults>
</compile_context>

<pallas_src>
import functools
import math

import jax
import jax.numpy as jnp
from jax.experimental import pallas as pl
from jax.experimental.pallas import tpu as pltpu


def _round_up(x, m):
    return ((x + m - 1) // m) * m


def _choose_tiles(M, E, P, T, itemsize, vmem_budget=24 * 1024 * 1024):
    """Pick (tm, tn, T_pad) so the double-buffered working set fits in VMEM."""
    T_pad = _round_up(T, 128)
    tn = 128
    for cand in (512, 256, 128):
        if T_pad % cand == 0:
            tn = cand
            break
    # Mosaic tiles the last two dims of the x block: E -> sublanes (mult of 8),
    # P -> lanes (padded to 128).  Account for that padding when budgeting.
    p_pad = _round_up(P, 128)
    e_sub = _round_up(E, 8)
    per_row = (2 * e_sub * p_pad * itemsize        # x block, double buffered
               + _round_up(E, 128) * 4             # pooled f32 scratch
               + 2 * tn * itemsize)                 # output tile, double buffered
    fixed = 2 * e_sub * tn * itemsize + 2 * 8 * tn * 4   # weight + bias blocks
    tm_cap = max(8, (vmem_budget - fixed) // per_row)
    tm_cap = max(8, (tm_cap // 8) * 8)
    tm = min(512, tm_cap, _round_up(M, 8))
    tm = max(8, (tm // 8) * 8)
    return tm, tn, T_pad


def _pooling_head_kernel(x_ref, w_ref, b_ref, o_ref, pooled_ref, *, inv_p):
    # x_ref:      (tm, E, P)   input rows for this M tile (full E, full P)
    # w_ref:      (E, tn)      weight columns for this T tile
    # b_ref:      (1, tn) f32  bias slice for this T tile
    # o_ref:      (tm, tn)     output tile
    # pooled_ref: (tm, E) f32  VMEM scratch, persists across the inner T axis
    t = pl.program_id(1)

    # Fused AdaptiveAvgPool1d(1): mean over P, computed once per M tile
    # (t == 0) and reused for every T tile of the same M tile.
    @pl.when(t == 0)
    def _():
        pooled_ref[...] = jnp.sum(x_ref[...].astype(jnp.float32), axis=-1) * inv_p

    pooled = pooled_ref[...].astype(w_ref.dtype)       # bf16 fast path if w is bf16
    y = jnp.dot(pooled, w_ref[...], preferred_element_type=jnp.float32)
    y = y + b_ref[...]                                 # (1, tn) broadcasts, f32
    o_ref[...] = y.astype(o_ref.dtype)
    # TODO(synk): dropout is identity at inference; training-mode stochastic
    # masking is not implemented in this kernel.


@functools.partial(jax.jit, static_argnames=("compute_dtype",))
def pooling_head_forward(x, weight, bias, *, compute_dtype=None):
    """
    x:      (B, N, E, P)
    weight: (E, T)   (== nn.Linear.weight.T)
    bias:   (T,)
    returns (B, N, T)
    """
    B, N, E, P = x.shape
    T = weight.shape[-1]
    M = B * N

    # Free view: collapse (B, N) -> M rows.  No transpose, no data movement.
    x2 = x.reshape(M, E, P)

    tm, tn, T_pad = _choose_tiles(M, E, P, T, x.dtype.itemsize)
    M_pad = _round_up(M, tm)

    if M_pad != M:
        x2 = jnp.pad(x2, ((0, M_pad - M), (0, 0), (0, 0)))
    if T_pad != T:
        w_p = jnp.pad(weight, ((0, 0), (0, T_pad - T)))
        b_p = jnp.pad(bias, (0, T_pad - T))
    else:
        w_p, b_p = weight, bias
    if compute_dtype is not None:
        w_p = w_p.astype(compute_dtype)                 # cast once, not per tile
    b_p = b_p.reshape(1, T_pad).astype(jnp.float32)     # bias add stays f32

    grid = (M_pad // tm, T_pad // tn)

    nbytes = lambda a: a.size * a.dtype.itemsize
    cost = pl.CostEstimate(
        flops=2 * M_pad * E * T_pad + M_pad * E * P,
        transcendentals=0,
        bytes_accessed=int(nbytes(x2) + nbytes(w_p) + nbytes(b_p)
                           + M_pad * T_pad * x.dtype.itemsize),
    )

    kernel = functools.partial(_pooling_head_kernel, inv_p=1.0 / P)

    out_pad = pl.pallas_call(
        kernel,
        out_shape=jax.ShapeDtypeStruct((M_pad, T_pad), x.dtype),
        grid_spec=pltpu.PrefetchScalarGridSpec(
            num_scalar_prefetch=0,
            grid=grid,
            in_specs=[
                # x tile: depends only on m -> stays resident across T tiles.
                pl.BlockSpec((tm, E, P), lambda m, t: (m, 0, 0)),
                # weight columns / bias slice for this T tile.
                pl.BlockSpec((E, tn), lambda m, t: (0, t)),
                pl.BlockSpec((1, tn), lambda m, t: (0, t)),
            ],
            out_specs=pl.BlockSpec((tm, tn), lambda m, t: (m, t)),
            scratch_shapes=[pltpu.VMEM((tm, E), jnp.float32)],
        ),
        compiler_params=pltpu.CompilerParams(
            # M tiles are independent -> shard across TensorCores; T axis is
            # "arbitrary" because the pooled scratch is reused across T tiles.
            dimension_semantics=("parallel", "arbitrary"),
            vmem_limit_bytes=48 * 1024 * 1024,
        ),
        cost_estimate=cost,
    )(x2, w_p, b_p)

    return out_pad[:M, :T].reshape(B, N, T)


if __name__ == "__main__":
    def _make(key, B, N, E, P, T):
        kx, kw, kb = jax.random.split(key, 3)
        x = jax.random.normal(kx, (B, N, E, P), jnp.float32)
        bound = 1.0 / math.sqrt(E)   # PyTorch nn.Linear init; weight stored (E, T)
        w = jax.random.uniform(kw, (E, T), jnp.float32, -bound, bound)
        b = jax.random.uniform(kb, (T,), jnp.float32, -bound, bound)
        return x, w, b

    def _ref(x, w, b):
        # AdaptiveAvgPool1d(1) == mean over P; dropout identity in eval mode.
        return x.mean(axis=-1) @ w + b

    key = jax.random.PRNGKey(0)
    k1, k2 = jax.random.split(key)
    ok = True

    # Test 1: small canonical shape; f32 path (tight tol) + bf16 MXU path.
    B, N, E, P, T = 2, 4, 32, 8, 16
    x, w, b = _make(k1, B, N, E, P, T)
    ref = _ref(x, w, b)
    out = jax.block_until_ready(pooling_head_forward(x, w, b))
    ok = ok and (out.shape == (B, N, T))
    ok = ok and bool(jnp.allclose(out, ref, atol=1e-5, rtol=1e-5))
    out_bf16 = jax.block_until_ready(
        pooling_head_forward(x, w, b, compute_dtype=jnp.bfloat16))
    ok = ok and bool(jnp.allclose(out_bf16, ref, atol=3e-2, rtol=3e-2))

    # Test 2: larger shape exercising multi-tile grid (M and T) and padding.
    B, N, E, P, T = 4, 150, 48, 24, 300
    x, w, b = _make(k2, B, N, E, P, T)
    ref = _ref(x, w, b)
    out = jax.block_until_ready(pooling_head_forward(x, w, b))
    ok = ok and (out.shape == (B, N, T))
    ok = ok and bool(jnp.allclose(out, ref, atol=1e-4, rtol=1e-4))

    print("KERNEL_OK" if ok else "KERNEL_MISMATCH")
</pallas_src>

<mosaic_0001>
module attributes {stable_mosaic.version = 11 : i64} {
  func.func @_pooling_head_kernel(%arg0: i32, %arg1: i32, %arg2: memref<8x32x8xf32, #tpu.memory_space<vmem>>, %arg3: memref<32x128xf32, #tpu.memory_space<vmem>>, %arg4: memref<1x128xf32, #tpu.memory_space<vmem>>, %arg5: memref<8x128xf32, #tpu.memory_space<vmem>>, %arg6: memref<8x32xf32, #tpu.memory_space<vmem>>) attributes {dimension_semantics = [#tpu.dimension_semantics<parallel>, #tpu.dimension_semantics<arbitrary>], iteration_bounds = array<i64: 1, 1>, scalar_prefetch = 0 : i64, scratch_operands = 1 : i64, tpu.core_type = #tpu.core_type<tc>, window_params = [{transform_indices = @transform_0, window_bounds = array<i64: 8, 32, 8>}, {transform_indices = @transform_1, window_bounds = array<i64: 32, 128>}, {transform_indices = @transform_2, window_bounds = array<i64: 1, 128>}, {transform_indices = @transform_3, window_bounds = array<i64: 8, 128>}]} {
    %c0_i32 = arith.constant 0 : i32
    %0 = arith.cmpi eq, %arg1, %c0_i32 : i32
    %1 = arith.extui %0 : i1 to i32
    %c0_i32_0 = arith.constant 0 : i32
    %2 = arith.cmpi ne, %1, %c0_i32_0 : i32
    scf.if %2 {
      %c0_8 = arith.constant 0 : index
      %c0_9 = arith.constant 0 : index
      %c0_10 = arith.constant 0 : index
      %10 = vector.load %arg2[%c0_8, %c0_9, %c0_10] : memref<8x32x8xf32, #tpu.memory_space<vmem>>, vector<8x32x8xf32>
      %cst_11 = arith.constant dense<0.000000e+00> : vector<8x32xf32>
      %11 = vector.multi_reduction <add>, %10, %cst_11 [2] : vector<8x32x8xf32> to vector<8x32xf32>
      %cst_12 = arith.constant 1.250000e-01 : f32
      %12 = vector.broadcast %cst_12 : f32 to vector<8x32xf32>
      %13 = arith.mulf %11, %12 : vector<8x32xf32>
      %c0_13 = arith.constant 0 : index
      %c0_14 = arith.constant 0 : index
      %14 = vector.load %arg6[%c0_13, %c0_14] : memref<8x32xf32, #tpu.memory_space<vmem>>, vector<8x32xf32>
      tpu.vector_store %arg6[%c0_13, %c0_14], %13 {strides = array<i32>} : memref<8x32xf32, #tpu.memory_space<vmem>>, vector<8x32xf32>,
    } else {
    }
    %c0 = arith.constant 0 : index
    %c0_1 = arith.constant 0 : index
    %3 = vector.load %arg6[%c0, %c0_1] : memref<8x32xf32, #tpu.memory_space<vmem>>, vector<8x32xf32>
    %c0_2 = arith.constant 0 : index
    %c0_3 = arith.constant 0 : index
    %4 = vector.load %arg3[%c0_2, %c0_3] : memref<32x128xf32, #tpu.memory_space<vmem>>, vector<32x128xf32>
    %cst = arith.constant dense<0.000000e+00> : vector<8x128xf32>
    %5 = tpu.matmul %3, %4, %cst {dimension_numbers = #tpu.dot_dimension_numbers<[1], [0], [0], [1], [0, 0, 1, 1], [], []>} : vector<8x32xf32>, vector<32x128xf32>, vector<8x128xf32> -> vector<8x128xf32>
    %c0_4 = arith.constant 0 : index
    %c0_5 = arith.constant 0 : index
    %6 = vector.load %arg4[%c0_4, %c0_5] : memref<1x128xf32, #tpu.memory_space<vmem>>, vector<1x128xf32>
    %7 = vector.broadcast %6 : vector<1x128xf32> to vector<8x128xf32>
    %8 = arith.addf %5, %7 : vector<8x128xf32>
    %c0_6 = arith.constant 0 : index
    %c0_7 = arith.constant 0 : index
    %9 = vector.load %arg5[%c0_6, %c0_7] : memref<8x128xf32, #tpu.memory_space<vmem>>, vector<8x128xf32>
    tpu.vector_store %arg5[%c0_6, %c0_7], %8 {strides = array<i32>} : memref<8x128xf32, #tpu.memory_space<vmem>>, vector<8x128xf32>,
    return
  }
  func.func @transform_0(%arg0: i32, %arg1: i32) -> (i32, i32, i32) {
    %c0_i32 = arith.constant 0 : i32
    %c0_i32_0 = arith.constant 0 : i32
    %c0_i32_1 = arith.constant 0 : i32
    return %arg0, %c0_i32, %c0_i32_0 : i32, i32, i32
  }
  func.func @transform_1(%arg0: i32, %arg1: i32) -> (i32, i32) {
    %c0_i32 = arith.constant 0 : i32
    %c0_i32_0 = arith.constant 0 : i32
    return %c0_i32, %arg1 : i32, i32
  }
  func.func @transform_2(%arg0: i32, %arg1: i32) -> (i32, i32) {
    %c0_i32 = arith.constant 0 : i32
    %c0_i32_0 = arith.constant 0 : i32
    return %c0_i32, %arg1 : i32, i32
  }
  func.func @transform_3(%arg0: i32, %arg1: i32) -> (i32, i32) {
    %c0_i32 = arith.constant 0 : i32
    return %arg0, %arg1 : i32, i32
  }
}

</mosaic_0001>

<llo_original>
// kernel: pooling_head_forward.1
$region0: #{pooling_head_forward.1}
  #allocation0 [shape = 'u32[]', space=smem, size = 0x4, offset = 0x4, fixed_abs, tag = 'smem constant byte address 0x4 - core index']
  #allocation1 [shape = 'u32[72,128]{1,0:T(1,128)}', space=vmem, size = 0x9000, scoped, tag = 'internal scratch']
  #allocation2 [shape = 'f32[8,32]{1,0:T(8,128)}', space=vmem, size = 0x1000, scoped, tag = 'scratch operand']
  %s0 = inlined_call_operand.vmem [shape: f32[8,32,8], index: 0, kind: input, shape index: {}]
  %s1 = inlined_call_operand.vmem [shape: f32[32,128], index: 1, kind: input, shape index: {}]
  %s2 = inlined_call_operand.vmem [shape: f32[1,128], index: 2, kind: input, shape index: {}]
  %s3 = inlined_call_operand.hbm [shape: f32[8,128], index: 3, kind: output, shape index: {}]
  %s4 = sld [smem:[#allocation0]]
  $region26: #{pooling_head_forward.1} parent=0
    _
  %s6 = ssub.s32 1, %s4
  %s7 = scalar_select 0, %s6, %s4
  $region1: #{pooling_head_forward.1} parent=0
    #allocation3 [shape = 'u8[4096]{0}', space=vmem, size = 0x1000, scoped, tag = 'output window, operand 0, single buffered']
    #allocation4 [shape = 's32[1]{0}', space=sflag, size = 0x4, scoped, tag = 'scoped memory for pooling_head_forward.1']
    %8 = vsyncpa [#allocation4], 0
    // Predicated region
    $region2: #{pooling_head_forward.1} parent=1 // pred_check
      _
    $region3: #{pooling_head_forward.1} parent=1 // pred_check_branch
      %10 = sbr.rel (0) target = $region5
    $region4: #{pooling_head_forward.1} parent=1 // pred_region
      _
    $region5: #{pooling_head_forward.1} parent=1 // pred_fallthru
      _
    // Predicated region
    $region6: #{pooling_head_forward.1} parent=1 // pred_check
      _
    $region7: #{pooling_head_forward.1} parent=1 // pred_check_branch
      %12 = sbr.rel (0) target = $region9
    $region8: #{pooling_head_forward.1} parent=1 // pred_region
      _
    $region9: #{pooling_head_forward.1} parent=1 // pred_fallthru
      _
    // Predicated region
    $region10: #{pooling_head_forward.1} parent=1 // pred_check
      _
    $region11: #{pooling_head_forward.1} parent=1 // pred_check_branch
      %14 = sbr.rel (0) target = $region13
    $region12: #{pooling_head_forward.1} parent=1 // pred_region
      _
    $region13: #{pooling_head_forward.1} parent=1 // pred_fallthru
      _
    %p15 = scmp.eq.s32.totalorder 0, 0
    // Predicated region
    $region14: #{pooling_head_forward.1} parent=1 // pred_check
      %p16 = pneg %p15
    $region15: #{pooling_head_forward.1} parent=1 // pred_check_branch
      %18 = sbr.rel (%p16) target = $region17
    $region16: #{pooling_head_forward.1} parent=1 // pred_region
      %v19 = vld [vmem:[%s0] sm:$0xff]
      %v20 = vld [vmem:[%s0 + $0x8] sm:$0xff]
      %v21 = vld [vmem:[%s0 + $0x10] sm:$0xff]
      %v22 = vld [vmem:[%s0 + $0x18] sm:$0xff]
      %v23 = vld [vmem:[%s0 + $0x20] sm:$0xff]
      %v24 = vld [vmem:[%s0 + $0x28] sm:$0xff]
      %v25 = vld [vmem:[%s0 + $0x30] sm:$0xff]
      %v26 = vld [vmem:[%s0 + $0x38] sm:$0xff]
      %v27 = vld [vmem:[%s0 + $0x40] sm:$0xff]
      %v28 = vld [vmem:[%s0 + $0x48] sm:$0xff]
      %v29 = vld [vmem:[%s0 + $0x50] sm:$0xff]
      %v30 = vld [vmem:[%s0 + $0x58] sm:$0xff]
      %v31 = vld [vmem:[%s0 + $0x60] sm:$0xff]
      %v32 = vld [vmem:[%s0 + $0x68] sm:$0xff]
      %v33 = vld [vmem:[%s0 + $0x70] sm:$0xff]
      %v34 = vld [vmem:[%s0 + $0x78] sm:$0xff]
      %v35 = vld [vmem:[%s0 + $0x80] sm:$0xff]
      %v36 = vld [vmem:[%s0 + $0x88] sm:$0xff]
      %v37 = vld [vmem:[%s0 + $0x90] sm:$0xff]
      %v38 = vld [vmem:[%s0 + $0x98] sm:$0xff]
      %v39 = vld [vmem:[%s0 + $0xa0] sm:$0xff]
      %v40 = vld [vmem:[%s0 + $0xa8] sm:$0xff]
      %v41 = vld [vmem:[%s0 + $0xb0] sm:$0xff]
      %v42 = vld [vmem:[%s0 + $0xb8] sm:$0xff]
      %v43 = vld [vmem:[%s0 + $0xc0] sm:$0xff]
      %v44 = vld [vmem:[%s0 + $0xc8] sm:$0xff]
      %v45 = vld [vmem:[%s0 + $0xd0] sm:$0xff]
      %v46 = vld [vmem:[%s0 + $0xd8] sm:$0xff]
      %v47 = vld [vmem:[%s0 + $0xe0] sm:$0xff]
      %v48 = vld [vmem:[%s0 + $0xe8] sm:$0xff]
      %v49 = vld [vmem:[%s0 + $0xf0] sm:$0xff]
      %v50 = vld [vmem:[%s0 + $0xf8] sm:$0xff]
      %vm51 = vcmask 64512
      %v52 = vsel %vm51, %v19, 0.0
      %53 = vadd.xlane.f32.xlu0 %v52
      %v54 = vpop.xlane.xlu0 %53
      %v55 = vsel %vm51, %v20, 0.0
      %56 = vadd.xlane.f32.xlu0 %v55
      %v57 = vpop.xlane.xlu0 %56
      %v58 = vsel %vm51, %v21, 0.0
      %59 = vadd.xlane.f32.xlu0 %v58
      %v60 = vpop.xlane.xlu0 %59
      %v61 = vsel %vm51, %v22, 0.0
      %62 = vadd.xlane.f32.xlu0 %v61
      %v63 = vpop.xlane.xlu0 %62
      %v64 = vsel %vm51, %v23, 0.0
      %65 = vadd.xlane.f32.xlu0 %v64
      %v66 = vpop.xlane.xlu0 %65
      %v67 = vsel %vm51, %v24, 0.0
      %68 = vadd.xlane.f32.xlu0 %v67
      %v69 = vpop.xlane.xlu0 %68
      %v70 = vsel %vm51, %v25, 0.0
      %71 = vadd.xlane.f32.xlu0 %v70
      %v72 = vpop.xlane.xlu0 %71
      %v73 = vsel %vm51, %v26, 0.0
      %74 = vadd.xlane.f32.xlu0 %v73
      %v75 = vpop.xlane.xlu0 %74
      %v76 = vsel %vm51, %v27, 0.0
      %77 = vadd.xlane.f32.xlu0 %v76
      %v78 = vpop.xlane.xlu0 %77
      %v79 = vsel %vm51, %v28, 0.0
      %80 = vadd.xlane.f32.xlu0 %v79
      %v81 = vpop.xlane.xlu0 %80
      %v82 = vsel %vm51, %v29, 0.0
      %83 = vadd.xlane.f32.xlu0 %v82
      %v84 = vpop.xlane.xlu0 %83
      %v85 = vsel %vm51, %v30, 0.0
      %86 = vadd.xlane.f32.xlu0 %v85
      %v87 = vpop.xlane.xlu0 %86
      %v88 = vsel %vm51, %v31, 0.0
      %89 = vadd.xlane.f32.xlu0 %v88
      %v90 = vpop.xlane.xlu0 %89
      %v91 = vsel %vm51, %v32, 0.0
      %92 = vadd.xlane.f32.xlu0 %v91
      %v93 = vpop.xlane.xlu0 %92
      %v94 = vsel %vm51, %v33, 0.0
      %95 = vadd.xlane.f32.xlu0 %v94
      %v96 = vpop.xlane.xlu0 %95
      %v97 = vsel %vm51, %v34, 0.0
      %98 = vadd.xlane.f32.xlu0 %v97
      %v99 = vpop.xlane.xlu0 %98
      %v100 = vsel %vm51, %v35, 0.0
      %101 = vadd.xlane.f32.xlu0 %v100
      %v102 = vpop.xlane.xlu0 %101
      %v103 = vsel %vm51, %v36, 0.0
      %104 = vadd.xlane.f32.xlu0 %v103
      %v105 = vpop.xlane.xlu0 %104
      %v106 = vsel %vm51, %v37, 0.0
      %107 = vadd.xlane.f32.xlu0 %v106
      %v108 = vpop.xlane.xlu0 %107
      %v109 = vsel %vm51, %v38, 0.0
      %110 = vadd.xlane.f32.xlu0 %v109
      %v111 = vpop.xlane.xlu0 %110
      %v112 = vsel %vm51, %v39, 0.0
      %113 = vadd.xlane.f32.xlu0 %v112
      %v114 = vpop.xlane.xlu0 %113
      %v115 = vsel %vm51, %v40, 0.0
      %116 = vadd.xlane.f32.xlu0 %v115
      %v117 = vpop.xlane.xlu0 %116
      %v118 = vsel %vm51, %v41, 0.0
      %119 = vadd.xlane.f32.xlu0 %v118
      %v120 = vpop.xlane.xlu0 %119
      %v121 = vsel %vm51, %v42, 0.0
      %122 = vadd.xlane.f32.xlu0 %v121
      %v123 = vpop.xlane.xlu0 %122
      %v124 = vsel %vm51, %v43, 0.0
      %125 = vadd.xlane.f32.xlu0 %v124
      %v126 = vpop.xlane.xlu0 %125
      %v127 = vsel %vm51, %v44, 0.0
      %128 = vadd.xlane.f32.xlu0 %v127
      %v129 = vpop.xlane.xlu0 %128
      %v130 = vsel %vm51, %v45, 0.0
      %131 = vadd.xlane.f32.xlu0 %v130
      %v132 = vpop.xlane.xlu0 %131
      %v133 = vsel %vm51, %v46, 0.0
      %134 = vadd.xlane.f32.xlu0 %v133
      %v135 = vpop.xlane.xlu0 %134
      %v136 = vsel %vm51, %v47, 0.0
      %137 = vadd.xlane.f32.xlu0 %v136
      %v138 = vpop.xlane.xlu0 %137
      %v139 = vsel %vm51, %v48, 0.0
      %140 = vadd.xlane.f32.xlu0 %v139
      %v141 = vpop.xlane.xlu0 %140
      %v142 = vsel %vm51, %v49, 0.0
      %143 = vadd.xlane.f32.xlu0 %v142
      %v144 = vpop.xlane.xlu0 %143
      %v145 = vsel %vm51, %v50, 0.0
      %146 = vadd.xlane.f32.xlu0 %v145
      %v147 = vpop.xlane.xlu0 %146
      %v148 = vmul.f32 %v54, 0.125
      %v149 = vmul.f32 %v57, 0.125
      %v150 = vmul.f32 %v60, 0.125
      %v151 = vmul.f32 %v63, 0.125
      %v152 = vmul.f32 %v66, 0.125
      %v153 = vmul.f32 %v69, 0.125
      %v154 = vmul.f32 %v72, 0.125
      %v155 = vmul.f32 %v75, 0.125
      %v156 = vmul.f32 %v78, 0.125
      %v157 = vmul.f32 %v81, 0.125
      %v158 = vmul.f32 %v84, 0.125
      %v159 = vmul.f32 %v87, 0.125
      %v160 = vmul.f32 %v90, 0.125
      %v161 = vmul.f32 %v93, 0.125
      %v162 = vmul.f32 %v96, 0.125
      %v163 = vmul.f32 %v99, 0.125
      %v164 = vmul.f32 %v102, 0.125
      %v165 = vmul.f32 %v105, 0.125
      %v166 = vmul.f32 %v108, 0.125
      %v167 = vmul.f32 %v111, 0.125
      %v168 = vmul.f32 %v114, 0.125
      %v169 = vmul.f32 %v117, 0.125
      %v170 = vmul.f32 %v120, 0.125
      %v171 = vmul.f32 %v123, 0.125
      %v172 = vmul.f32 %v126, 0.125
      %v173 = vmul.f32 %v129, 0.125
      %v174 = vmul.f32 %v132, 0.125
      %v175 = vmul.f32 %v135, 0.125
      %v176 = vmul.f32 %v138, 0.125
      %v177 = vmul.f32 %v141, 0.125
      %v178 = vmul.f32 %v144, 0.125
      %v179 = vmul.f32 %v147, 0.125
      %v212 = vlaneseq
      %v213 = vand.u32 %v212, 127
      %v214 = vperm.slane %v148, %v213
      %v215 = vadd.s32 %v213, 4294967288
      %v216 = vperm.slane %v149, %v215
      %vm217 = vcmask 130112
      %v218 = vsel %vm217, %v216, %v214
      %v219 = vadd.s32 %v213, 4294967280
      %v220 = vperm.slane %v150, %v219
      %vm221 = vcmask 195712
      %v222 = vsel %vm221, %v220, %v218
      %v223 = vadd.s32 %v213, 4294967272
      %v224 = vperm.slane %v151, %v223
      %vm225 = vcmask 261312
      %v226 = vsel %vm225, %v224, %v222
      %v227 = vperm.slane %v152, %v213
      %v228 = vperm.slane %v153, %v215
      %v229 = vsel %vm217, %v228, %v227
      %v230 = vperm.slane %v154, %v219
      %v231 = vsel %vm221, %v230, %v229
      %v232 = vperm.slane %v155, %v223
      %v233 = vsel %vm225, %v232, %v231
      %v234 = vperm.slane %v156, %v213
      %v235 = vperm.slane %v157, %v215
      %v236 = vsel %vm217, %v235, %v234
      %v237 = vperm.slane %v158, %v219
      %v238 = vsel %vm221, %v237, %v236
      %v239 = vperm.slane %v159, %v223
      %v240 = vsel %vm225, %v239, %v238
      %v241 = vperm.slane %v160, %v213
      %v242 = vperm.slane %v161, %v215
      %v243 = vsel %vm217, %v242, %v241
      %v244 = vperm.slane %v162, %v219
      %v245 = vsel %vm221, %v244, %v243
      %v246 = vperm.slane %v163, %v223
      %v247 = vsel %vm225, %v246, %v245
      %v248 = vperm.slane %v164, %v213
      %v249 = vperm.slane %v165, %v215
      %v250 = vsel %vm217, %v249, %v248
      %v251 = vperm.slane %v166, %v219
      %v252 = vsel %vm221, %v251, %v250
      %v253 = vperm.slane %v167, %v223
      %v254 = vsel %vm225, %v253, %v252
      %v255 = vperm.slane %v168, %v213
      %v256 = vperm.slane %v169, %v215
      %v257 = vsel %vm217, %v256, %v255
      %v258 = vperm.slane %v170, %v219
      %v259 = vsel %vm221, %v258, %v257
      %v260 = vperm.slane %v171, %v223
      %v261 = vsel %vm225, %v260, %v259
      %v262 = vperm.slane %v172, %v213
      %v263 = vperm.slane %v173, %v215
      %v264 = vsel %vm217, %v263, %v262
      %v265 = vperm.slane %v174, %v219
      %v266 = vsel %vm221, %v265, %v264
      %v267 = vperm.slane %v175, %v223
      %v268 = vsel %vm225, %v267, %v266
      %v269 = vperm.slane %v176, %v213
      %v270 = vperm.slane %v177, %v215
      %v271 = vsel %vm217, %v270, %v269
      %v272 = vperm.slane %v178, %v219
      %v273 = vsel %vm221, %v272, %v271
      %v274 = vperm.slane %v179, %v223
      %v275 = vsel %vm225, %v274, %v273
      %vm276 = vcmask 1041409
      %v277 = vsel %vm276, %v233, %v226
      %vm278 = vcmask 1042434
      %v279 = vsel %vm278, %v240, %v277
      %vm280 = vcmask 1043459
      %v281 = vsel %vm280, %v247, %v279
      %vm282 = vcmask 1044484
      %v283 = vsel %vm282, %v254, %v281
      %vm284 = vcmask 1045509
      %v285 = vsel %vm284, %v261, %v283
      %vm286 = vcmask 1046534
      %v287 = vsel %vm286, %v268, %v285
      %vm288 = vcmask 1047559
      %v289 = vsel %vm288, %v275, %v287
      %vm291 = vcmask 261120
      %292 = vst.msk [vmem:[#allocation2] sm:$0xff] %vm291, %v289
    $region17: #{pooling_head_forward.1} parent=1 // pred_fallthru
      _
    %v293 = vld [vmem:[#allocation2] sm:$0xff]
    %v294 = vld [vmem:[%s1] sm:$0xff]
    %v295 = vld [vmem:[%s1 + $0x8] sm:$0xff]
    %v296 = vld [vmem:[%s1 + $0x10] sm:$0xff]
    %v297 = vld [vmem:[%s1 + $0x18] sm:$0xff]
    %v298 = vld [vmem:[%s2] sm:$0x1]
    %v300 = vperm.slane %v298, 0
    %vm302 = vcmask 261120
    %v304 = vsel %vm302, %v293, 0
    %306 = vmatpush.msra.mxu0 0.0
    %307 = vmatpush.msra.mxu0 0.0
    %308 = vmatpush.msra.mxu0 0.0
    %309 = vmatpush.msra.mxu0 0.0
    %310 = vmatpush.msra.mxu0 0.0
    %311 = vmatpush.msra.mxu0 0.0
    %312 = vmatpush.msra.mxu0 0.0
    %313 = vmatpush.msra.mxu0 0.0
    %314 = vmatpush.msra.mxu0 0.0
    %315 = vmatpush.msra.mxu0 0.0
    %316 = vmatpush.msra.mxu0 0.0
    %317 = vmatpush.msra.mxu0 0.0
    %318 = vmatpush.msra.mxu0 %v297
    %319 = vmatpush.msra.mxu0 %v296
    %320 = vmatpush.msra.mxu0 %v295
    %321 = vmatpush.msra.mxu0 %v294
    %322 = vmatmul.f32.gmra.mxu0 %v304
    %v323 = vpop.f32.mrf.mxu0
    %v324 = vadd.f32 %v300, %v323
    %325 = vdwg.mxu0
    %326 = vst [vmem:[#allocation3] sm:$0xff] %v324
    // Predicated region
    $region18: #{pooling_head_forward.1} parent=1 // pred_check
      _
    $region19: #{pooling_head_forward.1} parent=1 // pred_check_branch
      %328 = sbr.rel (0) target = $region21
    $region20: #{pooling_head_forward.1} parent=1 // pred_region
      %330 = vsyncadd [#allocation4], 0
      %s332 = sshll.u32 [#allocation3], 4
      %s333 = int_to_ptr.vmem [resolvable:$true] %s332
      %s334 = sshll.u32 %s3, 4
      %s335 = int_to_ptr.hbm [resolvable:$true] %s334
      %337 = dma.vmem_to_hbm [thread:$0]  %s333, 128, %s335, [#allocation4]
    $region21: #{pooling_head_forward.1} parent=1 // pred_fallthru
      _
    // Predicated region
    $region22: #{pooling_head_forward.1} parent=1 // pred_check
      _
    $region23: #{pooling_head_forward.1} parent=1 // pred_check_branch
      %339 = sbr.rel (0) target = $region25
    $region24: #{pooling_head_forward.1} parent=1 // pred_region
      %341 = dma.done [#allocation4], 128
    $region25: #{pooling_head_forward.1} parent=1 // pred_fallthru
      _
    %342 = vsyncpa [#allocation4], 1

</llo_original>
